<compile_context>
chip_gen: v7x
topology: tpu7x:2x2x1
jax: 0.10.0
libtpu: 0.0.40
codegen_flags: <defaults>
</compile_context>

<pallas_src>
import functools

import jax
import jax.numpy as jnp
from jax.experimental import pallas as pl
from jax.experimental.pallas import tpu as pltpu


def _round_up(x, m):
    return ((x + m - 1) // m) * m


def _mlp_kernel(x_ref, w0_ref, b0_ref, w1_ref, b1_ref, w2_ref, b2_ref, o_ref):
    # Hidden layer 0: Linear (bf16 in, f32 accumulate) + bias + ReLU.
    h = jnp.dot(x_ref[...], w0_ref[...], preferred_element_type=jnp.float32)
    h = jnp.maximum(h + b0_ref[...], 0.0)
    # Hidden layer 1: Linear + bias + ReLU.
    h = jnp.dot(h.astype(w1_ref.dtype), w1_ref[...],
                preferred_element_type=jnp.float32)
    h = jnp.maximum(h + b1_ref[...], 0.0)
    # Output layer: Linear + bias (no activation). Output width is lane-dense
    # (padded to a multiple of 128) so stores are unmasked.
    out = jnp.dot(h.astype(w2_ref.dtype), w2_ref[...],
                  preferred_element_type=jnp.float32)
    o_ref[...] = (out + b2_ref[...]).astype(o_ref.dtype)


@functools.partial(jax.jit, static_argnames=("batch_tile",))
def net_forward(x, params, batch_tile=256):
    """Pallas implementation of Net.forward(x, t) (t is unused by forward)."""
    (w0, b0), (w1, b1), (w2, b2) = params
    B, n_in = x.shape
    H0 = w0.shape[1]
    H1 = w1.shape[1]
    n_out = w2.shape[1]

    # --- prepare operands -------------------------------------------------
    # bf16 feeds for the MXU (f32 accumulation inside the kernel).
    x_bf = x.astype(jnp.bfloat16)
    w0_bf = w0.astype(jnp.bfloat16)
    w1_bf = w1.astype(jnp.bfloat16)

    # Lane-dense output: pad n_out up to a multiple of 128 with zero columns.
    n_out_p = _round_up(n_out, 128)
    w2_bf = jnp.pad(w2, ((0, 0), (0, n_out_p - n_out))).astype(jnp.bfloat16)
    b2_p = jnp.pad(b2.astype(jnp.float32), ((0, 0), (0, n_out_p - n_out)))
    b0_f = b0.astype(jnp.float32)
    b1_f = b1.astype(jnp.float32)

    # Batch tiling: large MXU-friendly tile, but shrink for tiny batches so the
    # small self-test doesn't pad 8 rows up to 256. Pad B to a tile multiple.
    tile = min(batch_tile, _round_up(B, 8))
    B_p = _round_up(B, tile)
    if B_p != B:
        x_bf = jnp.pad(x_bf, ((0, B_p - B), (0, 0)))
    grid = (B_p // tile,)

    def x_map(i):
        return (i, 0)

    def rep_map(i):
        return (0, 0)

    # --- cost estimate (advisory) ------------------------------------------
    flops = 2 * B_p * (n_in * H0 + H0 * H1 + H1 * n_out_p)
    bytes_accessed = (
        x_bf.size * 2
        + (w0_bf.size + w1_bf.size + w2_bf.size) * 2
        + (b0_f.size + b1_f.size + b2_p.size) * 4
        + B_p * n_out_p * 4
    )
    cost = pl.CostEstimate(flops=flops, transcendentals=0,
                           bytes_accessed=bytes_accessed)

    out_p = pl.pallas_call(
        _mlp_kernel,
        out_shape=jax.ShapeDtypeStruct((B_p, n_out_p), jnp.float32),
        grid_spec=pltpu.PrefetchScalarGridSpec(
            num_scalar_prefetch=0,
            grid=grid,
            in_specs=[
                pl.BlockSpec((tile, n_in), x_map),        # x tile (bf16)
                pl.BlockSpec(w0_bf.shape, rep_map),       # W0 (bf16)
                pl.BlockSpec(b0_f.shape, rep_map),        # b0 (f32)
                pl.BlockSpec(w1_bf.shape, rep_map),       # W1 (bf16)
                pl.BlockSpec(b1_f.shape, rep_map),        # b1 (f32)
                pl.BlockSpec(w2_bf.shape, rep_map),       # W2 padded (bf16)
                pl.BlockSpec(b2_p.shape, rep_map),        # b2 padded (f32)
            ],
            out_specs=pl.BlockSpec((tile, n_out_p), x_map),
        ),
        compiler_params=pltpu.CompilerParams(
            dimension_semantics=("parallel",),
        ),
        cost_estimate=cost,
    )(x_bf, w0_bf, b0_f, w1_bf, b1_f, w2_bf, b2_p)

    # Strip batch padding and output-lane padding.
    return out_p[:B, :n_out]


def init_params(key, n_inputs, hidden_size, n_outputs, num_layers=2):
    """Deterministic init mirroring the MLP layer shapes (stored as (in, out))."""
    sizes = [n_inputs] + [hidden_size] * num_layers + [n_outputs]
    params = []
    for i in range(len(sizes) - 1):
        key, wk, bk = jax.random.split(key, 3)
        fan_in = sizes[i]
        bound = 1.0 / jnp.sqrt(fan_in)
        w = jax.random.uniform(
            wk, (sizes[i], sizes[i + 1]), jnp.float32, -bound, bound
        )
        b = jax.random.uniform(
            bk, (1, sizes[i + 1]), jnp.float32, -bound, bound
        )
        params.append((w, b))
    return params


def reference_forward(x, params):
    """Plain-JAX reference with the same bf16-input / f32-accumulate recipe."""
    (w0, b0), (w1, b1), (w2, b2) = params
    xb = x.astype(jnp.bfloat16)
    h = jnp.dot(xb, w0.astype(jnp.bfloat16),
                preferred_element_type=jnp.float32) + b0
    h = jnp.maximum(h, 0.0)
    h = jnp.dot(h.astype(jnp.bfloat16), w1.astype(jnp.bfloat16),
                preferred_element_type=jnp.float32) + b1
    h = jnp.maximum(h, 0.0)
    return jnp.dot(h.astype(jnp.bfloat16), w2.astype(jnp.bfloat16),
                   preferred_element_type=jnp.float32) + b2


if __name__ == "__main__":
    # Small shapes consistent with the module: MLP on flat feature vectors.
    batch = 8
    n_inputs = 64       # n_inputs
    hidden_size = 128   # args.hidden_size
    num_layers = 2      # args.num_layers
    n_outputs = 32      # n_outputs

    key = jax.random.PRNGKey(0)
    key, xk = jax.random.split(key)
    x = jax.random.normal(xk, (batch, n_inputs), jnp.float32)
    params = init_params(key, n_inputs, hidden_size, n_outputs, num_layers)

    t = 0  # task id, ignored by forward (matches PyTorch semantics)
    out = net_forward(x, params)  # batch_tile default 256; tile shrinks for tiny B
    out = jax.block_until_ready(out)

    ref = reference_forward(x, params)
    assert out.shape == (batch, n_outputs)
    assert jnp.allclose(out, ref, atol=1e-2, rtol=1e-2), (
        float(jnp.max(jnp.abs(out - ref)))
    )

    print("KERNEL_OK")
</pallas_src>

<mosaic_0001>
module attributes {stable_mosaic.version = 11 : i64} {
  func.func @_mlp_kernel(%arg0: i32, %arg1: memref<8x64xbf16, #tpu.memory_space<vmem>>, %arg2: memref<64x128xbf16, #tpu.memory_space<vmem>>, %arg3: memref<1x128xf32, #tpu.memory_space<vmem>>, %arg4: memref<128x128xbf16, #tpu.memory_space<vmem>>, %arg5: memref<1x128xf32, #tpu.memory_space<vmem>>, %arg6: memref<128x128xbf16, #tpu.memory_space<vmem>>, %arg7: memref<1x128xf32, #tpu.memory_space<vmem>>, %arg8: memref<8x128xf32, #tpu.memory_space<vmem>>) attributes {dimension_semantics = [#tpu.dimension_semantics<parallel>], iteration_bounds = array<i64: 1>, scalar_prefetch = 0 : i64, scratch_operands = 0 : i64, tpu.core_type = #tpu.core_type<tc>, window_params = [{transform_indices = @transform_0, window_bounds = array<i64: 8, 64>}, {pipeline_mode = #tpu.pipeline_mode<synchronous>, transform_indices = @transform_1, window_bounds = array<i64: 64, 128>}, {pipeline_mode = #tpu.pipeline_mode<synchronous>, transform_indices = @transform_2, window_bounds = array<i64: 1, 128>}, {pipeline_mode = #tpu.pipeline_mode<synchronous>, transform_indices = @transform_3, window_bounds = array<i64: 128, 128>}, {pipeline_mode = #tpu.pipeline_mode<synchronous>, transform_indices = @transform_4, window_bounds = array<i64: 1, 128>}, {pipeline_mode = #tpu.pipeline_mode<synchronous>, transform_indices = @transform_5, window_bounds = array<i64: 128, 128>}, {pipeline_mode = #tpu.pipeline_mode<synchronous>, transform_indices = @transform_6, window_bounds = array<i64: 1, 128>}, {transform_indices = @transform_7, window_bounds = array<i64: 8, 128>}]} {
    %c0 = arith.constant 0 : index
    %c0_0 = arith.constant 0 : index
    %0 = vector.load %arg1[%c0, %c0_0] : memref<8x64xbf16, #tpu.memory_space<vmem>>, vector<8x64xbf16>
    %c0_1 = arith.constant 0 : index
    %c0_2 = arith.constant 0 : index
    %1 = vector.load %arg2[%c0_1, %c0_2] : memref<64x128xbf16, #tpu.memory_space<vmem>>, vector<64x128xbf16>
    %cst = arith.constant dense<0.000000e+00> : vector<8x128xf32>
    %2 = tpu.matmul %0, %1, %cst {dimension_numbers = #tpu.dot_dimension_numbers<[1], [0], [0], [1], [0, 0, 1, 1], [], []>} : vector<8x64xbf16>, vector<64x128xbf16>, vector<8x128xf32> -> vector<8x128xf32>
    %c0_3 = arith.constant 0 : index
    %c0_4 = arith.constant 0 : index
    %3 = vector.load %arg3[%c0_3, %c0_4] : memref<1x128xf32, #tpu.memory_space<vmem>>, vector<1x128xf32>
    %4 = vector.broadcast %3 : vector<1x128xf32> to vector<8x128xf32>
    %5 = arith.addf %2, %4 : vector<8x128xf32>
    %cst_5 = arith.constant 0.000000e+00 : f32
    %6 = vector.broadcast %cst_5 : f32 to vector<8x128xf32>
    %7 = arith.maximumf %5, %6 : vector<8x128xf32>
    %8 = arith.truncf %7 : vector<8x128xf32> to vector<8x128xbf16>
    %c0_6 = arith.constant 0 : index
    %c0_7 = arith.constant 0 : index
    %9 = vector.load %arg4[%c0_6, %c0_7] : memref<128x128xbf16, #tpu.memory_space<vmem>>, vector<128x128xbf16>
    %cst_8 = arith.constant dense<0.000000e+00> : vector<8x128xf32>
    %10 = tpu.matmul %8, %9, %cst_8 {dimension_numbers = #tpu.dot_dimension_numbers<[1], [0], [0], [1], [0, 0, 1, 1], [], []>} : vector<8x128xbf16>, vector<128x128xbf16>, vector<8x128xf32> -> vector<8x128xf32>
    %c0_9 = arith.constant 0 : index
    %c0_10 = arith.constant 0 : index
    %11 = vector.load %arg5[%c0_9, %c0_10] : memref<1x128xf32, #tpu.memory_space<vmem>>, vector<1x128xf32>
    %12 = vector.broadcast %11 : vector<1x128xf32> to vector<8x128xf32>
    %13 = arith.addf %10, %12 : vector<8x128xf32>
    %cst_11 = arith.constant 0.000000e+00 : f32
    %14 = vector.broadcast %cst_11 : f32 to vector<8x128xf32>
    %15 = arith.maximumf %13, %14 : vector<8x128xf32>
    %16 = arith.truncf %15 : vector<8x128xf32> to vector<8x128xbf16>
    %c0_12 = arith.constant 0 : index
    %c0_13 = arith.constant 0 : index
    %17 = vector.load %arg6[%c0_12, %c0_13] : memref<128x128xbf16, #tpu.memory_space<vmem>>, vector<128x128xbf16>
    %cst_14 = arith.constant dense<0.000000e+00> : vector<8x128xf32>
    %18 = tpu.matmul %16, %17, %cst_14 {dimension_numbers = #tpu.dot_dimension_numbers<[1], [0], [0], [1], [0, 0, 1, 1], [], []>} : vector<8x128xbf16>, vector<128x128xbf16>, vector<8x128xf32> -> vector<8x128xf32>
    %c0_15 = arith.constant 0 : index
    %c0_16 = arith.constant 0 : index
    %19 = vector.load %arg7[%c0_15, %c0_16] : memref<1x128xf32, #tpu.memory_space<vmem>>, vector<1x128xf32>
    %20 = vector.broadcast %19 : vector<1x128xf32> to vector<8x128xf32>
    %21 = arith.addf %18, %20 : vector<8x128xf32>
    %c0_17 = arith.constant 0 : index
    %c0_18 = arith.constant 0 : index
    %22 = vector.load %arg8[%c0_17, %c0_18] : memref<8x128xf32, #tpu.memory_space<vmem>>, vector<8x128xf32>
    tpu.vector_store %arg8[%c0_17, %c0_18], %21 {strides = array<i32>} : memref<8x128xf32, #tpu.memory_space<vmem>>, vector<8x128xf32>,
    return
  }
  func.func @transform_0(%arg0: i32) -> (i32, i32) {
    %c0_i32 = arith.constant 0 : i32
    %c0_i32_0 = arith.constant 0 : i32
    return %arg0, %c0_i32 : i32, i32
  }
  func.func @transform_1(%arg0: i32) -> (i32, i32) {
    %c0_i32 = arith.constant 0 : i32
    %c0_i32_0 = arith.constant 0 : i32
    %c0_i32_1 = arith.constant 0 : i32
    return %c0_i32, %c0_i32_0 : i32, i32
  }
  func.func @transform_2(%arg0: i32) -> (i32, i32) {
    %c0_i32 = arith.constant 0 : i32
    %c0_i32_0 = arith.constant 0 : i32
    %c0_i32_1 = arith.constant 0 : i32
    return %c0_i32, %c0_i32_0 : i32, i32
  }
  func.func @transform_3(%arg0: i32) -> (i32, i32) {
    %c0_i32 = arith.constant 0 : i32
    %c0_i32_0 = arith.constant 0 : i32
    %c0_i32_1 = arith.constant 0 : i32
    return %c0_i32, %c0_i32_0 : i32, i32
  }
  func.func @transform_4(%arg0: i32) -> (i32, i32) {
    %c0_i32 = arith.constant 0 : i32
    %c0_i32_0 = arith.constant 0 : i32
    %c0_i32_1 = arith.constant 0 : i32
    return %c0_i32, %c0_i32_0 : i32, i32
  }
  func.func @transform_5(%arg0: i32) -> (i32, i32) {
    %c0_i32 = arith.constant 0 : i32
    %c0_i32_0 = arith.constant 0 : i32
    %c0_i32_1 = arith.constant 0 : i32
    return %c0_i32, %c0_i32_0 : i32, i32
  }
  func.func @transform_6(%arg0: i32) -> (i32, i32) {
    %c0_i32 = arith.constant 0 : i32
    %c0_i32_0 = arith.constant 0 : i32
    %c0_i32_1 = arith.constant 0 : i32
    return %c0_i32, %c0_i32_0 : i32, i32
  }
  func.func @transform_7(%arg0: i32) -> (i32, i32) {
    %c0_i32 = arith.constant 0 : i32
    %c0_i32_0 = arith.constant 0 : i32
    return %arg0, %c0_i32 : i32, i32
  }
}

</mosaic_0001>

<llo_original>
// kernel: net_forward.1
$region0: #{net_forward.1}
  #allocation0 [shape = 'u32[]', space=smem, size = 0x4, offset = 0x4, fixed_abs, tag = 'smem constant byte address 0x4 - core index']
  #allocation1 [shape = 'u32[144,128]{1,0:T(1,128)}', space=vmem, size = 0x12000, scoped, tag = 'internal scratch']
  %s0 = inlined_call_operand.vmem [shape: bf16[8,64], index: 0, kind: input, shape index: {}]
  %s1 = inlined_call_operand.vmem [shape: bf16[64,128], index: 1, kind: input, shape index: {}]
  %s2 = inlined_call_operand.vmem [shape: f32[1,128], index: 2, kind: input, shape index: {}]
  %s3 = inlined_call_operand.vmem [shape: bf16[128,128], index: 3, kind: input, shape index: {}]
  %s4 = inlined_call_operand.vmem [shape: f32[1,128], index: 4, kind: input, shape index: {}]
  %s5 = inlined_call_operand.vmem [shape: bf16[128,128], index: 5, kind: input, shape index: {}]
  %s6 = inlined_call_operand.vmem [shape: f32[1,128], index: 6, kind: input, shape index: {}]
  %s7 = inlined_call_operand.hbm [shape: f32[8,128], index: 7, kind: output, shape index: {}]
  %s8 = sld [smem:[#allocation0]]
  $region38: #{net_forward.1} parent=0
    _
  %s10 = ssub.s32 1, %s8
  %s11 = scalar_select 0, %s10, %s8
  $region1: #{net_forward.1} parent=0
    #allocation2 [shape = 'u8[4096]{0}', space=vmem, size = 0x1000, scoped, tag = 'output window, operand 0, single buffered']
    #allocation3 [shape = 's32[1]{0}', space=sflag, size = 0x4, scoped, tag = 'scoped memory for net_forward.1']
    %12 = vsyncpa [#allocation3], 0
    // Predicated region
    $region2: #{net_forward.1} parent=1 // pred_check
      _
    $region3: #{net_forward.1} parent=1 // pred_check_branch
      %14 = sbr.rel (0) target = $region5
    $region4: #{net_forward.1} parent=1 // pred_region
      _
    $region5: #{net_forward.1} parent=1 // pred_fallthru
      _
    // Predicated region
    $region6: #{net_forward.1} parent=1 // pred_check
      _
    $region7: #{net_forward.1} parent=1 // pred_check_branch
      %16 = sbr.rel (0) target = $region9
    $region8: #{net_forward.1} parent=1 // pred_region
      _
    $region9: #{net_forward.1} parent=1 // pred_fallthru
      _
    // Predicated region
    $region10: #{net_forward.1} parent=1 // pred_check
      _
    $region11: #{net_forward.1} parent=1 // pred_check_branch
      %18 = sbr.rel (0) target = $region13
    $region12: #{net_forward.1} parent=1 // pred_region
      _
    $region13: #{net_forward.1} parent=1 // pred_fallthru
      _
    // Predicated region
    $region14: #{net_forward.1} parent=1 // pred_check
      _
    $region15: #{net_forward.1} parent=1 // pred_check_branch
      %20 = sbr.rel (0) target = $region17
    $region16: #{net_forward.1} parent=1 // pred_region
      _
    $region17: #{net_forward.1} parent=1 // pred_fallthru
      _
    // Predicated region
    $region18: #{net_forward.1} parent=1 // pred_check
      _
    $region19: #{net_forward.1} parent=1 // pred_check_branch
      %22 = sbr.rel (0) target = $region21
    $region20: #{net_forward.1} parent=1 // pred_region
      _
    $region21: #{net_forward.1} parent=1 // pred_fallthru
      _
    // Predicated region
    $region22: #{net_forward.1} parent=1 // pred_check
      _
    $region23: #{net_forward.1} parent=1 // pred_check_branch
      %24 = sbr.rel (0) target = $region25
    $region24: #{net_forward.1} parent=1 // pred_region
      _
    $region25: #{net_forward.1} parent=1 // pred_fallthru
      _
    // Predicated region
    $region26: #{net_forward.1} parent=1 // pred_check
      _
    $region27: #{net_forward.1} parent=1 // pred_check_branch
      %26 = sbr.rel (0) target = $region29
    $region28: #{net_forward.1} parent=1 // pred_region
      _
    $region29: #{net_forward.1} parent=1 // pred_fallthru
      _
    %v28 = vld [vmem:[%s0] sm:$0xf]
    %v29 = vld [vmem:[%s1] sm:$0xf]
    %v30 = vld [vmem:[%s1 + $0x4] sm:$0xf]
    %v31 = vld [vmem:[%s1 + $0x8] sm:$0xf]
    %v32 = vld [vmem:[%s1 + $0xc] sm:$0xf]
    %v33 = vld [vmem:[%s1 + $0x10] sm:$0xf]
    %v34 = vld [vmem:[%s1 + $0x14] sm:$0xf]
    %v35 = vld [vmem:[%s1 + $0x18] sm:$0xf]
    %v36 = vld [vmem:[%s1 + $0x1c] sm:$0xf]
    %v37 = vld [vmem:[%s2] sm:$0x1]
    %v39 = vlaneseq
    %v40 = vshrl.u32 %v39, 7
    %v41 = vsub.s32 0, %v40
    %v42 = vrot.slane %v37, %v41
    %v52 = vunpack.c.l.b16 %v29
    %v53 = vunpack.c.l.b16 %v30
    %v54 = vunpack.c.l.b16 %v31
    %v55 = vunpack.c.l.b16 %v32
    %v56 = vunpack.c.l.b16 %v33
    %v57 = vunpack.c.l.b16 %v34
    %v58 = vunpack.c.l.b16 %v35
    %v59 = vunpack.c.l.b16 %v36
    %v60 = vpack.c.b16 %v53, %v52
    %v61 = vpack.c.b16 %v55, %v54
    %v62 = vpack.c.b16 %v57, %v56
    %v63 = vpack.c.b16 %v59, %v58
    %vm68 = vcmask 523264
    %v70 = vsel %vm68, %v28, 0
    %72 = vmatprep.subr.bf16.mxu0 0
    %73 = vmatpush1.bf16.msra.mxu0 %v60
    %74 = vmatprep.subr.bf16.mxu0 0
    %75 = vmatpush1.bf16.msra.mxu0 %v61
    %76 = vmatprep.subr.bf16.mxu0 0
    %77 = vmatpush1.bf16.msra.mxu0 %v62
    %78 = vmatprep.subr.bf16.mxu0 0
    %79 = vmatpush1.bf16.msra.mxu0 %v63
    %80 = vmatprep.subr.bf16.mxu0 0
    %81 = vmatpush1.bf16.msra.mxu0 0
    %82 = vmatprep.subr.bf16.mxu0 0
    %83 = vmatpush1.bf16.msra.mxu0 0
    %84 = vmatprep.subr.bf16.mxu0 0
    %85 = vmatpush1.bf16.msra.mxu0 0
    %86 = vmatprep.subr.bf16.mxu0 0
    %87 = vmatpush1.bf16.msra.mxu0 0
    %88 = vmatprep.subr.bf16.mxu0 0
    %89 = vmatpush1.bf16.msra.mxu0 0
    %90 = vmatprep.subr.bf16.mxu0 0
    %91 = vmatpush1.bf16.msra.mxu0 0
    %92 = vmatprep.subr.bf16.mxu0 0
    %93 = vmatpush1.bf16.msra.mxu0 0
    %94 = vmatprep.subr.bf16.mxu0 0
    %95 = vmatpush1.bf16.msra.mxu0 0
    %96 = vmatprep.subr.bf16.mxu0 0
    %97 = vmatpush1.bf16.msra.mxu0 0
    %98 = vmatprep.subr.bf16.mxu0 0
    %99 = vmatpush1.bf16.msra.mxu0 0
    %100 = vmatprep.subr.bf16.mxu0 0
    %101 = vmatpush1.bf16.msra.mxu0 0
    %102 = vmatprep.subr.bf16.mxu0 0
    %103 = vmatpush1.bf16.msra.mxu0 0
    %104 = vmatprep.mubr.bf16.mxu0 0
    %105 = vmatmul.mubr.bf16.gmra.mrb[0].mxu0 %v70
    %v106 = vpop.f32.mrb[0].mxu0
    %v107 = vadd.f32 %v42, %v106
    %v108 = vpop.f32.mrb[0].mxu0
    %v109 = vpop.f32.mrb[0].mxu0
    %v110 = vpop.f32.mrb[0].mxu0
    %111 = vdwg.mxu0
    %v112 = vmax.f32 %v107, 0.0
    %v113 = vpack.c.bf16 %v112, %v112
    %v114 = vld [vmem:[%s3] sm:$0xf]
    %v115 = vld [vmem:[%s3 + $0x4] sm:$0xf]
    %v116 = vld [vmem:[%s3 + $0x8] sm:$0xf]
    %v117 = vld [vmem:[%s3 + $0xc] sm:$0xf]
    %v118 = vld [vmem:[%s3 + $0x10] sm:$0xf]
    %v119 = vld [vmem:[%s3 + $0x14] sm:$0xf]
    %v120 = vld [vmem:[%s3 + $0x18] sm:$0xf]
    %v121 = vld [vmem:[%s3 + $0x1c] sm:$0xf]
    %v122 = vld [vmem:[%s3 + $0x20] sm:$0xf]
    %v123 = vld [vmem:[%s3 + $0x24] sm:$0xf]
    %v124 = vld [vmem:[%s3 + $0x28] sm:$0xf]
    %v125 = vld [vmem:[%s3 + $0x2c] sm:$0xf]
    %v126 = vld [vmem:[%s3 + $0x30] sm:$0xf]
    %v127 = vld [vmem:[%s3 + $0x34] sm:$0xf]
    %v128 = vld [vmem:[%s3 + $0x38] sm:$0xf]
    %v129 = vld [vmem:[%s3 + $0x3c] sm:$0xf]
    %v130 = vld [vmem:[%s4] sm:$0x1]
    %v132 = vlaneseq
    %v133 = vshrl.u32 %v132, 7
    %v134 = vsub.s32 0, %v133
    %v135 = vrot.slane %v130, %v134
    %v153 = vunpack.c.l.b16 %v114
    %v154 = vunpack.c.l.b16 %v115
    %v155 = vunpack.c.l.b16 %v116
    %v156 = vunpack.c.l.b16 %v117
    %v157 = vunpack.c.l.b16 %v118
    %v158 = vunpack.c.l.b16 %v119
    %v159 = vunpack.c.l.b16 %v120
    %v160 = vunpack.c.l.b16 %v121
    %v161 = vunpack.c.l.b16 %v122
    %v162 = vunpack.c.l.b16 %v123
    %v163 = vunpack.c.l.b16 %v124
    %v164 = vunpack.c.l.b16 %v125
    %v165 = vunpack.c.l.b16 %v126
    %v166 = vunpack.c.l.b16 %v127
    %v167 = vunpack.c.l.b16 %v128
    %v168 = vunpack.c.l.b16 %v129
    %v169 = vpack.c.b16 %v154, %v153
    %v170 = vpack.c.b16 %v156, %v155
    %v171 = vpack.c.b16 %v158, %v157
    %v172 = vpack.c.b16 %v160, %v159
    %v173 = vpack.c.b16 %v162, %v161
    %v174 = vpack.c.b16 %v164, %v163
    %v175 = vpack.c.b16 %v166, %v165
    %v176 = vpack.c.b16 %v168, %v167
    %185 = vmatprep.subr.bf16.mxu0 0
    %186 = vmatpush1.bf16.msra.mxu0 %v169
    %187 = vmatprep.subr.bf16.mxu0 0
    %188 = vmatpush1.bf16.msra.mxu0 %v170
    %189 = vmatprep.subr.bf16.mxu0 0
    %190 = vmatpush1.bf16.msra.mxu0 %v171
    %191 = vmatprep.subr.bf16.mxu0 0
    %192 = vmatpush1.bf16.msra.mxu0 %v172
    %193 = vmatprep.subr.bf16.mxu0 0
    %194 = vmatpush1.bf16.msra.mxu0 %v173
    %195 = vmatprep.subr.bf16.mxu0 0
    %196 = vmatpush1.bf16.msra.mxu0 %v174
    %197 = vmatprep.subr.bf16.mxu0 0
    %198 = vmatpush1.bf16.msra.mxu0 %v175
    %199 = vmatprep.subr.bf16.mxu0 0
    %200 = vmatpush1.bf16.msra.mxu0 %v176
    %201 = vmatprep.subr.bf16.mxu0 0
    %202 = vmatpush1.bf16.msra.mxu0 0
    %203 = vmatprep.subr.bf16.mxu0 0
    %204 = vmatpush1.bf16.msra.mxu0 0
    %205 = vmatprep.subr.bf16.mxu0 0
    %206 = vmatpush1.bf16.msra.mxu0 0
    %207 = vmatprep.subr.bf16.mxu0 0
    %208 = vmatpush1.bf16.msra.mxu0 0
    %209 = vmatprep.subr.bf16.mxu0 0
    %210 = vmatpush1.bf16.msra.mxu0 0
    %211 = vmatprep.subr.bf16.mxu0 0
    %212 = vmatpush1.bf16.msra.mxu0 0
    %213 = vmatprep.subr.bf16.mxu0 0
    %214 = vmatpush1.bf16.msra.mxu0 0
    %215 = vmatprep.subr.bf16.mxu0 0
    %216 = vmatpush1.bf16.msra.mxu0 0
    %217 = vmatprep.mubr.bf16.mxu0 0
    %218 = vmatmul.mubr.bf16.gmra.mrb[0].mxu0 %v113
    %v219 = vpop.f32.mrb[0].mxu0
    %v220 = vadd.f32 %v135, %v219
    %v221 = vpop.f32.mrb[0].mxu0
    %v222 = vpop.f32.mrb[0].mxu0
    %v223 = vpop.f32.mrb[0].mxu0
    %224 = vdwg.mxu0
    %v225 = vmax.f32 %v220, 0.0
    %v226 = vpack.c.bf16 %v225, %v225
    %v227 = vld [vmem:[%s5] sm:$0xf]
    %v228 = vld [vmem:[%s5 + $0x4] sm:$0xf]
    %v229 = vld [vmem:[%s5 + $0x8] sm:$0xf]
    %v230 = vld [vmem:[%s5 + $0xc] sm:$0xf]
    %v231 = vld [vmem:[%s5 + $0x10] sm:$0xf]
    %v232 = vld [vmem:[%s5 + $0x14] sm:$0xf]
    %v233 = vld [vmem:[%s5 + $0x18] sm:$0xf]
    %v234 = vld [vmem:[%s5 + $0x1c] sm:$0xf]
    %v235 = vld [vmem:[%s5 + $0x20] sm:$0xf]
    %v236 = vld [vmem:[%s5 + $0x24] sm:$0xf]
    %v237 = vld [vmem:[%s5 + $0x28] sm:$0xf]
    %v238 = vld [vmem:[%s5 + $0x2c] sm:$0xf]
    %v239 = vld [vmem:[%s5 + $0x30] sm:$0xf]
    %v240 = vld [vmem:[%s5 + $0x34] sm:$0xf]
    %v241 = vld [vmem:[%s5 + $0x38] sm:$0xf]
    %v242 = vld [vmem:[%s5 + $0x3c] sm:$0xf]
    %v243 = vld [vmem:[%s6] sm:$0x1]
    %v245 = vlaneseq
    %v246 = vshrl.u32 %v245, 7
    %v247 = vsub.s32 0, %v246
    %v248 = vrot.slane %v243, %v247
    %v266 = vunpack.c.l.b16 %v227
    %v267 = vunpack.c.l.b16 %v228
    %v268 = vunpack.c.l.b16 %v229
    %v269 = vunpack.c.l.b16 %v230
    %v270 = vunpack.c.l.b16 %v231
    %v271 = vunpack.c.l.b16 %v232
    %v272 = vunpack.c.l.b16 %v233
    %v273 = vunpack.c.l.b16 %v234
    %v274 = vunpack.c.l.b16 %v235
    %v275 = vunpack.c.l.b16 %v236
    %v276 = vunpack.c.l.b16 %v237
    %v277 = vunpack.c.l.b16 %v238
    %v278 = vunpack.c.l.b16 %v239
    %v279 = vunpack.c.l.b16 %v240
    %v280 = vunpack.c.l.b16 %v241
    %v281 = vunpack.c.l.b16 %v242
    %v282 = vpack.c.b16 %v267, %v266
    %v283 = vpack.c.b16 %v269, %v268
    %v284 = vpack.c.b16 %v271, %v270
    %v285 = vpack.c.b16 %v273, %v272
    %v286 = vpack.c.b16 %v275, %v274
    %v287 = vpack.c.b16 %v277, %v276
    %v288 = vpack.c.b16 %v279, %v278
    %v289 = vpack.c.b16 %v281, %v280
    %298 = vmatprep.subr.bf16.mxu0 0
    %299 = vmatpush1.bf16.msra.mxu0 %v282
    %300 = vmatprep.subr.bf16.mxu0 0
    %301 = vmatpush1.bf16.msra.mxu0 %v283
    %302 = vmatprep.subr.bf16.mxu0 0
    %303 = vmatpush1.bf16.msra.mxu0 %v284
    %304 = vmatprep.subr.bf16.mxu0 0
    %305 = vmatpush1.bf16.msra.mxu0 %v285
    %306 = vmatprep.subr.bf16.mxu0 0
    %307 = vmatpush1.bf16.msra.mxu0 %v286
    %308 = vmatprep.subr.bf16.mxu0 0
    %309 = vmatpush1.bf16.msra.mxu0 %v287
    %310 = vmatprep.subr.bf16.mxu0 0
    %311 = vmatpush1.bf16.msra.mxu0 %v288
    %312 = vmatprep.subr.bf16.mxu0 0
    %313 = vmatpush1.bf16.msra.mxu0 %v289
    %314 = vmatprep.subr.bf16.mxu0 0
    %315 = vmatpush1.bf16.msra.mxu0 0
    %316 = vmatprep.subr.bf16.mxu0 0
    %317 = vmatpush1.bf16.msra.mxu0 0
    %318 = vmatprep.subr.bf16.mxu0 0
    %319 = vmatpush1.bf16.msra.mxu0 0
    %320 = vmatprep.subr.bf16.mxu0 0
    %321 = vmatpush1.bf16.msra.mxu0 0
    %322 = vmatprep.subr.bf16.mxu0 0
    %323 = vmatpush1.bf16.msra.mxu0 0
    %324 = vmatprep.subr.bf16.mxu0 0
    %325 = vmatpush1.bf16.msra.mxu0 0
    %326 = vmatprep.subr.bf16.mxu0 0
    %327 = vmatpush1.bf16.msra.mxu0 0
    %328 = vmatprep.subr.bf16.mxu0 0
    %329 = vmatpush1.bf16.msra.mxu0 0
    %330 = vmatprep.mubr.bf16.mxu0 0
    %331 = vmatmul.mubr.bf16.gmra.mrb[0].mxu0 %v226
    %v332 = vpop.f32.mrb[0].mxu0
    %v333 = vadd.f32 %v248, %v332
    %v334 = vpop.f32.mrb[0].mxu0
    %v335 = vpop.f32.mrb[0].mxu0
    %v336 = vpop.f32.mrb[0].mxu0
    %337 = vdwg.mxu0
    %338 = vst [vmem:[#allocation2] sm:$0xff] %v333
    // Predicated region
    $region30: #{net_forward.1} parent=1 // pred_check
      _
    $region31: #{net_forward.1} parent=1 // pred_check_branch
      %340 = sbr.rel (0) target = $region33
    $region32: #{net_forward.1} parent=1 // pred_region
      %s342 = ssub.s32 128, 128
      %343 = vsyncadd [#allocation3], %s342
      %s345 = sshll.u32 [#allocation2], 4
      %s346 = int_to_ptr.vmem [resolvable:$true] %s345
      %348 = dma.vmem_to_hbm [thread:$0]  %s346, 128, %s7, [#allocation3]
    $region33: #{net_forward.1} parent=1 // pred_fallthru
      _
    // Predicated region
    $region34: #{net_forward.1} parent=1 // pred_check
      _
    $region35: #{net_forward.1} parent=1 // pred_check_branch
      %350 = sbr.rel (0) target = $region37
    $region36: #{net_forward.1} parent=1 // pred_region
      %351 = dma.done [#allocation3], 128
    $region37: #{net_forward.1} parent=1 // pred_fallthru
      _
    %352 = vsyncpa [#allocation3], 1

</llo_original>
